<compile_context>
chip_gen: v6e
topology: v6e:2x2x1
jax: 0.10.0
libtpu: 0.0.40
codegen_flags: <defaults>
</compile_context>

<pallas_src>
import functools

import jax
import jax.numpy as jnp
from jax import lax
from jax.experimental import pallas as pl
from jax.experimental.pallas import tpu as pltpu

EPS = 1e-5
_N_TILE = 256          # per-core batch tile for the large-N (two-pass) path


def _round_up(x, m):
    return (x + m - 1) // m * m


def _pad_cast(a, shape, dtype):
    """Cast to dtype; zero-pad to `shape` only when actually needed."""
    a = a.astype(dtype)
    if a.shape == tuple(shape):
        return a
    out = jnp.zeros(shape, dtype)
    return out.at[tuple(slice(0, s) for s in a.shape)].set(a)


def _vmem_cap_bytes():
    """Generation-aware VMEM budget, leaving headroom for Mosaic internal scratch."""
    try:
        cap = int(pltpu.get_tpu_info().vmem_capacity_bytes)
    except Exception:
        cap = 64 << 20
    return max(cap - (16 << 20), 32 << 20)


def _pick_th(h_pad):
    """Largest H tile giving >= min(4, H_pad/128) grid steps, so weight DMA is
    hidden behind MXU compute instead of serially exposed."""
    n128 = h_pad // 128
    target = min(4, n128)
    k = max(d for d in range(1, n128 + 1) if n128 % d == 0 and n128 // d >= target)
    return 128 * k


# --------------------------------------------------------------------------- #
# Kernels
# --------------------------------------------------------------------------- #
def _fused_kernel(n_rows, x_ref, w1_ref, gamma_ref, beta_ref, w2_ref, b2_ref, o_ref):
    """Single-N-tile path: inline (global, exact) BN batch stats per H tile;
    accumulate Linear2 directly into the resident output block."""
    step = pl.program_id(0)

    @pl.when(step == 0)
    def _():
        o_ref[...] = jnp.broadcast_to(b2_ref[...], o_ref.shape)

    # Linear1 on this H tile: bf16 operands, f32 MXU accumulation.
    h = jnp.dot(x_ref[...], w1_ref[...], preferred_element_type=jnp.float32)

    # One-pass BatchNorm1d batch stats (biased variance), f32 VPU/EUP math.
    inv_n = 1.0 / n_rows
    mean = jnp.sum(h, axis=0, keepdims=True) * inv_n
    ex2 = jnp.sum(h * h, axis=0, keepdims=True) * inv_n
    var = ex2 - mean * mean
    scale = gamma_ref[...] * lax.rsqrt(var + EPS)
    shift = beta_ref[...] - mean * scale

    h_act = jnp.maximum(h * scale + shift, 0.0).astype(jnp.bfloat16)
    o_ref[...] += jnp.dot(h_act, w2_ref[...], preferred_element_type=jnp.float32)


def _bn_stats_kernel(n_rows, x_ref, w1_ref, gamma_ref, beta_ref, scale_ref, shift_ref):
    """Global batch stats for one H tile -> per-feature affine (scale, shift)."""
    h = jnp.dot(x_ref[...], w1_ref[...], preferred_element_type=jnp.float32)
    inv_n = 1.0 / n_rows
    mean = jnp.sum(h, axis=0, keepdims=True) * inv_n
    ex2 = jnp.sum(h * h, axis=0, keepdims=True) * inv_n
    var = ex2 - mean * mean
    scale = gamma_ref[...] * lax.rsqrt(var + EPS)
    scale_ref[...] = scale
    shift_ref[...] = beta_ref[...] - mean * scale


def _apply_kernel(x_ref, w1_ref, scale_ref, shift_ref, w2_ref, b2_ref, o_ref):
    """N-tiled path: matmul -> precomputed BN affine -> ReLU -> matmul-accumulate."""
    h_step = pl.program_id(1)

    @pl.when(h_step == 0)
    def _():
        o_ref[...] = jnp.broadcast_to(b2_ref[...], o_ref.shape)

    h = jnp.dot(x_ref[...], w1_ref[...], preferred_element_type=jnp.float32)
    h_act = jnp.maximum(h * scale_ref[...] + shift_ref[...], 0.0).astype(jnp.bfloat16)
    o_ref[...] += jnp.dot(h_act, w2_ref[...], preferred_element_type=jnp.float32)


# --------------------------------------------------------------------------- #
# Wrappers
# --------------------------------------------------------------------------- #
def prepare_predictor_params(w1_t, b1, gamma, beta, w2_t, b2):
    """Pad/cast parameters ONCE (e.g. per optimizer step), not every forward.

    w1_t: (D, H)  Linear1 weight pre-transposed (D == output_dim, H == hidden_dim)
    b1:   (H,)    exact no-op before training-mode BatchNorm -> dropped
    gamma/beta: (H,) BatchNorm1d affine params
    w2_t: (H, D)  Linear2 weight pre-transposed
    b2:   (D,)
    """
    del b1  # cancels exactly inside training-mode BatchNorm
    D, H = w1_t.shape
    D_pad, H_pad = _round_up(D, 128), _round_up(H, 128)
    return {
        "D": D, "H": H, "D_pad": D_pad, "H_pad": H_pad,
        "w1": _pad_cast(w1_t, (D_pad, H_pad), jnp.bfloat16),
        "w2": _pad_cast(w2_t, (H_pad, D_pad), jnp.bfloat16),
        "gamma": _pad_cast(gamma.reshape(1, -1), (1, H_pad), jnp.float32),
        "beta": _pad_cast(beta.reshape(1, -1), (1, H_pad), jnp.float32),
        "b2": _pad_cast(b2.reshape(1, -1), (1, D_pad), jnp.float32),
    }


def predictor_mlp_apply(x, params):
    """Fused PredictorMLP forward (training-mode BatchNorm, batch statistics)."""
    N, D = x.shape
    D_pad, H_pad = params["D_pad"], params["H_pad"]
    tH = _pick_th(H_pad)
    n_h = H_pad // tH
    vmem_cap = _vmem_cap_bytes()

    small_batch = N <= _N_TILE
    N_pad = N if small_batch else _round_up(N, _N_TILE)
    # Zero-padded batch rows contribute 0 to both sum(h) and sum(h*h), so BN
    # statistics computed with the true N stay exact; padded output rows are
    # sliced off at the end.
    x_p = _pad_cast(x, (N_pad, D_pad), jnp.bfloat16)

    w1, w2 = params["w1"], params["w2"]
    gamma, beta, b2 = params["gamma"], params["beta"], params["b2"]

    # Double-buffered bf16 w1/w2 H tiles.
    w_tiles = 2 * 2 * (D_pad * tH + tH * D_pad)

    if small_batch:
        # Single N tile: inline global BN stats; o_ref is the accumulator.
        resident = N_pad * D_pad * (2 + 4)            # x bf16 + out f32
        vmem_limit = min(2 * resident + w_tiles + (8 << 20), vmem_cap)
        out = pl.pallas_call(
            functools.partial(_fused_kernel, float(N)),
            out_shape=jax.ShapeDtypeStruct((N_pad, D_pad), jnp.float32),
            grid_spec=pltpu.PrefetchScalarGridSpec(
                num_scalar_prefetch=0,
                grid=(n_h,),
                in_specs=[
                    pl.BlockSpec((N_pad, D_pad), lambda h: (0, 0)),   # x (resident)
                    pl.BlockSpec((D_pad, tH), lambda h: (0, h)),      # w1 H tile
                    pl.BlockSpec((1, tH), lambda h: (0, h)),          # gamma
                    pl.BlockSpec((1, tH), lambda h: (0, h)),          # beta
                    pl.BlockSpec((tH, D_pad), lambda h: (h, 0)),      # w2 H tile
                    pl.BlockSpec((1, D_pad), lambda h: (0, 0)),       # b2
                ],
                out_specs=pl.BlockSpec((N_pad, D_pad), lambda h: (0, 0)),
            ),
            compiler_params=pltpu.CompilerParams(
                dimension_semantics=("arbitrary",),   # H is a reduction axis
                vmem_limit_bytes=vmem_limit,
            ),
        )(x_p, w1, gamma, beta, w2, b2)
    else:
        # Large N: (1) small stats kernel -> global per-feature (scale, shift);
        # (2) N-parallel main kernel (both TensorCores on v7x).
        stats_limit = min(2 * N_pad * D_pad * 2 + w_tiles + (8 << 20), vmem_cap)
        scale, shift = pl.pallas_call(
            functools.partial(_bn_stats_kernel, float(N)),
            out_shape=(jax.ShapeDtypeStruct((1, H_pad), jnp.float32),
                       jax.ShapeDtypeStruct((1, H_pad), jnp.float32)),
            grid_spec=pltpu.PrefetchScalarGridSpec(
                num_scalar_prefetch=0,
                grid=(n_h,),
                in_specs=[
                    pl.BlockSpec((N_pad, D_pad), lambda h: (0, 0)),   # x (resident)
                    pl.BlockSpec((D_pad, tH), lambda h: (0, h)),      # w1 H tile
                    pl.BlockSpec((1, tH), lambda h: (0, h)),          # gamma
                    pl.BlockSpec((1, tH), lambda h: (0, h)),          # beta
                ],
                out_specs=[pl.BlockSpec((1, tH), lambda h: (0, h)),
                           pl.BlockSpec((1, tH), lambda h: (0, h))],
            ),
            compiler_params=pltpu.CompilerParams(
                dimension_semantics=("parallel",),
                vmem_limit_bytes=stats_limit,
            ),
        )(x_p, w1, gamma, beta)

        n_n = N_pad // _N_TILE
        resident = _N_TILE * D_pad * (2 + 4)
        apply_limit = min(2 * resident + w_tiles + (8 << 20), vmem_cap)
        out = pl.pallas_call(
            _apply_kernel,
            out_shape=jax.ShapeDtypeStruct((N_pad, D_pad), jnp.float32),
            grid_spec=pltpu.PrefetchScalarGridSpec(
                num_scalar_prefetch=0,
                grid=(n_n, n_h),
                in_specs=[
                    pl.BlockSpec((_N_TILE, D_pad), lambda n, h: (n, 0)),  # x N tile
                    pl.BlockSpec((D_pad, tH), lambda n, h: (0, h)),       # w1 H tile
                    pl.BlockSpec((1, tH), lambda n, h: (0, h)),           # scale
                    pl.BlockSpec((1, tH), lambda n, h: (0, h)),           # shift
                    pl.BlockSpec((tH, D_pad), lambda n, h: (h, 0)),       # w2 H tile
                    pl.BlockSpec((1, D_pad), lambda n, h: (0, 0)),        # b2
                ],
                out_specs=pl.BlockSpec((_N_TILE, D_pad), lambda n, h: (n, 0)),
            ),
            compiler_params=pltpu.CompilerParams(
                dimension_semantics=("parallel", "arbitrary"),
                vmem_limit_bytes=apply_limit,
            ),
        )(x_p, w1, scale, shift, w2, b2)

    if N_pad == N and D_pad == D:
        return out
    return out[:N, :D]


def predictor_mlp(x, w1_t, b1, gamma, beta, w2_t, b2):
    """Convenience wrapper: pad/cast params, then run the forward pass."""
    # TODO(synk): BatchNorm1d eval mode (running_mean / running_var) is not
    # implemented; this kernel matches PyTorch training-mode batch statistics.
    return predictor_mlp_apply(
        x, prepare_predictor_params(w1_t, b1, gamma, beta, w2_t, b2))


# --------------------------------------------------------------------------- #
# Reference + self-test
# --------------------------------------------------------------------------- #
def reference(x, w1_t, b1, gamma, beta, w2_t, b2):
    h = x @ w1_t + b1
    mean = jnp.mean(h, axis=0, keepdims=True)
    var = jnp.mean((h - mean) ** 2, axis=0, keepdims=True)
    h = (h - mean) / jnp.sqrt(var + EPS) * gamma + beta
    h = jnp.maximum(h, 0.0)
    return h @ w2_t + b2


def _make_case(key, batch, hidden_dim, output_dim):
    kx, kw1, kb1, kw2, kb2 = jax.random.split(key, 5)
    x = jax.random.normal(kx, (batch, output_dim), dtype=jnp.float32)
    # Synthetic PyTorch-style init (W1: (H, D), W2: (D, H)); passed transposed.
    bound1 = 1.0 / (output_dim ** 0.5)
    w1 = jax.random.uniform(kw1, (hidden_dim, output_dim), jnp.float32, -bound1, bound1)
    b1 = jax.random.uniform(kb1, (hidden_dim,), jnp.float32, -bound1, bound1)
    bound2 = 1.0 / (hidden_dim ** 0.5)
    w2 = jax.random.uniform(kw2, (output_dim, hidden_dim), jnp.float32, -bound2, bound2)
    b2 = jax.random.uniform(kb2, (output_dim,), jnp.float32, -bound2, bound2)
    gamma = jnp.ones((hidden_dim,), jnp.float32)   # BatchNorm1d weight
    beta = jnp.zeros((hidden_dim,), jnp.float32)   # BatchNorm1d bias
    return x, w1, b1, gamma, beta, w2, b2


if __name__ == "__main__":
    key = jax.random.PRNGKey(0)
    k_small, k_large = jax.random.split(key)

    # Small shapes consistent with PredictorMLP(input_dim, hidden_dim, output_dim):
    # forward input is (batch, output_dim). Exercises the fused single-N-tile path.
    x, w1, b1, gamma, beta, w2, b2 = _make_case(k_small, 8, 64, 32)
    out = predictor_mlp(x, w1.T, b1, gamma, beta, w2.T, b2)
    out = jax.block_until_ready(out)
    ref = reference(x, w1.T, b1, gamma, beta, w2.T, b2)
    assert out.shape == ref.shape
    # Looser tolerance: matmul operands are bf16 (f32 accumulation / BN math).
    assert jnp.allclose(out, ref, atol=5e-2, rtol=5e-2), "small-batch mismatch"

    # Larger batch exercising the N-parallel two-pass (global BN stats) path.
    x, w1, b1, gamma, beta, w2, b2 = _make_case(k_large, 512, 256, 128)
    out = predictor_mlp(x, w1.T, b1, gamma, beta, w2.T, b2)
    out = jax.block_until_ready(out)
    ref = reference(x, w1.T, b1, gamma, beta, w2.T, b2)
    assert out.shape == ref.shape
    assert jnp.allclose(out, ref, atol=5e-2, rtol=5e-2), "large-batch mismatch"

    print("KERNEL_OK")
</pallas_src>

<mosaic_0001>
module attributes {stable_mosaic.version = 11 : i64} {
  func.func @_fused_kernel(%arg0: i32, %arg1: memref<8x128xbf16, #tpu.memory_space<vmem>>, %arg2: memref<128x128xbf16, #tpu.memory_space<vmem>>, %arg3: memref<1x128xf32, #tpu.memory_space<vmem>>, %arg4: memref<1x128xf32, #tpu.memory_space<vmem>>, %arg5: memref<128x128xbf16, #tpu.memory_space<vmem>>, %arg6: memref<1x128xf32, #tpu.memory_space<vmem>>, %arg7: memref<8x128xf32, #tpu.memory_space<vmem>>) attributes {dimension_semantics = [#tpu.dimension_semantics<arbitrary>], iteration_bounds = array<i64: 1>, scalar_prefetch = 0 : i64, scratch_operands = 0 : i64, tpu.core_type = #tpu.core_type<tc>, window_params = [{pipeline_mode = #tpu.pipeline_mode<synchronous>, transform_indices = @transform_0, window_bounds = array<i64: 8, 128>}, {transform_indices = @transform_1, window_bounds = array<i64: 128, 128>}, {transform_indices = @transform_2, window_bounds = array<i64: 1, 128>}, {transform_indices = @transform_3, window_bounds = array<i64: 1, 128>}, {transform_indices = @transform_4, window_bounds = array<i64: 128, 128>}, {pipeline_mode = #tpu.pipeline_mode<synchronous>, transform_indices = @transform_5, window_bounds = array<i64: 1, 128>}, {pipeline_mode = #tpu.pipeline_mode<synchronous>, transform_indices = @transform_6, window_bounds = array<i64: 8, 128>}]} {
    %c0_i32 = arith.constant 0 : i32
    %0 = arith.cmpi eq, %arg0, %c0_i32 : i32
    %1 = arith.extui %0 : i1 to i32
    %c0_i32_0 = arith.constant 0 : i32
    %2 = arith.cmpi ne, %1, %c0_i32_0 : i32
    scf.if %2 {
      %c0_21 = arith.constant 0 : index
      %c0_22 = arith.constant 0 : index
      %37 = vector.load %arg6[%c0_21, %c0_22] : memref<1x128xf32, #tpu.memory_space<vmem>>, vector<1x128xf32>
      %38 = vector.shape_cast %37 : vector<1x128xf32> to vector<1x128xf32>
      %39 = vector.broadcast %38 : vector<1x128xf32> to vector<8x128xf32>
      %c0_23 = arith.constant 0 : index
      %c0_24 = arith.constant 0 : index
      %40 = vector.load %arg7[%c0_23, %c0_24] : memref<8x128xf32, #tpu.memory_space<vmem>>, vector<8x128xf32>
      tpu.vector_store %arg7[%c0_23, %c0_24], %39 {strides = array<i32>} : memref<8x128xf32, #tpu.memory_space<vmem>>, vector<8x128xf32>,
    } else {
    }
    %c0 = arith.constant 0 : index
    %c0_1 = arith.constant 0 : index
    %3 = vector.load %arg1[%c0, %c0_1] : memref<8x128xbf16, #tpu.memory_space<vmem>>, vector<8x128xbf16>
    %c0_2 = arith.constant 0 : index
    %c0_3 = arith.constant 0 : index
    %4 = vector.load %arg2[%c0_2, %c0_3] : memref<128x128xbf16, #tpu.memory_space<vmem>>, vector<128x128xbf16>
    %cst = arith.constant dense<0.000000e+00> : vector<8x128xf32>
    %5 = tpu.matmul %3, %4, %cst {dimension_numbers = #tpu.dot_dimension_numbers<[1], [0], [0], [1], [0, 0, 1, 1], [], []>} : vector<8x128xbf16>, vector<128x128xbf16>, vector<8x128xf32> -> vector<8x128xf32>
    %cst_4 = arith.constant dense<0.000000e+00> : vector<128xf32>
    %6 = vector.multi_reduction <add>, %5, %cst_4 [0] : vector<8x128xf32> to vector<128xf32>
    %7 = vector.shape_cast %6 : vector<128xf32> to vector<1x128xf32>
    %cst_5 = arith.constant 1.250000e-01 : f32
    %8 = vector.broadcast %cst_5 : f32 to vector<1x128xf32>
    %9 = arith.mulf %7, %8 : vector<1x128xf32>
    %10 = arith.mulf %5, %5 : vector<8x128xf32>
    %cst_6 = arith.constant dense<0.000000e+00> : vector<128xf32>
    %11 = vector.multi_reduction <add>, %10, %cst_6 [0] : vector<8x128xf32> to vector<128xf32>
    %12 = vector.shape_cast %11 : vector<128xf32> to vector<1x128xf32>
    %cst_7 = arith.constant 1.250000e-01 : f32
    %13 = vector.broadcast %cst_7 : f32 to vector<1x128xf32>
    %14 = arith.mulf %12, %13 : vector<1x128xf32>
    %15 = arith.mulf %9, %9 : vector<1x128xf32>
    %16 = arith.subf %14, %15 : vector<1x128xf32>
    %c0_8 = arith.constant 0 : index
    %c0_9 = arith.constant 0 : index
    %17 = vector.load %arg3[%c0_8, %c0_9] : memref<1x128xf32, #tpu.memory_space<vmem>>, vector<1x128xf32>
    %cst_10 = arith.constant 9.99999974E-6 : f32
    %18 = vector.broadcast %cst_10 : f32 to vector<1x128xf32>
    %19 = arith.addf %16, %18 : vector<1x128xf32>
    %20 = math.rsqrt %19 : vector<1x128xf32>
    %21 = arith.mulf %17, %20 : vector<1x128xf32>
    %c0_11 = arith.constant 0 : index
    %c0_12 = arith.constant 0 : index
    %22 = vector.load %arg4[%c0_11, %c0_12] : memref<1x128xf32, #tpu.memory_space<vmem>>, vector<1x128xf32>
    %23 = arith.mulf %9, %21 : vector<1x128xf32>
    %24 = arith.subf %22, %23 : vector<1x128xf32>
    %25 = vector.broadcast %21 : vector<1x128xf32> to vector<8x128xf32>
    %26 = arith.mulf %5, %25 : vector<8x128xf32>
    %27 = vector.broadcast %24 : vector<1x128xf32> to vector<8x128xf32>
    %28 = arith.addf %26, %27 : vector<8x128xf32>
    %cst_13 = arith.constant 0.000000e+00 : f32
    %29 = vector.broadcast %cst_13 : f32 to vector<8x128xf32>
    %30 = arith.maximumf %28, %29 : vector<8x128xf32>
    %31 = arith.truncf %30 : vector<8x128xf32> to vector<8x128xbf16>
    %c0_14 = arith.constant 0 : index
    %c0_15 = arith.constant 0 : index
    %32 = vector.load %arg7[%c0_14, %c0_15] : memref<8x128xf32, #tpu.memory_space<vmem>>, vector<8x128xf32>
    %c0_16 = arith.constant 0 : index
    %c0_17 = arith.constant 0 : index
    %33 = vector.load %arg5[%c0_16, %c0_17] : memref<128x128xbf16, #tpu.memory_space<vmem>>, vector<128x128xbf16>
    %cst_18 = arith.constant dense<0.000000e+00> : vector<8x128xf32>
    %34 = tpu.matmul %31, %33, %cst_18 {dimension_numbers = #tpu.dot_dimension_numbers<[1], [0], [0], [1], [0, 0, 1, 1], [], []>} : vector<8x128xbf16>, vector<128x128xbf16>, vector<8x128xf32> -> vector<8x128xf32>
    %35 = arith.addf %32, %34 : vector<8x128xf32>
    %c0_19 = arith.constant 0 : index
    %c0_20 = arith.constant 0 : index
    %36 = vector.load %arg7[%c0_19, %c0_20] : memref<8x128xf32, #tpu.memory_space<vmem>>, vector<8x128xf32>
    tpu.vector_store %arg7[%c0_19, %c0_20], %35 {strides = array<i32>} : memref<8x128xf32, #tpu.memory_space<vmem>>, vector<8x128xf32>,
    return
  }
  func.func @transform_0(%arg0: i32) -> (i32, i32) {
    %c0_i32 = arith.constant 0 : i32
    %c0_i32_0 = arith.constant 0 : i32
    %c0_i32_1 = arith.constant 0 : i32
    return %c0_i32, %c0_i32_0 : i32, i32
  }
  func.func @transform_1(%arg0: i32) -> (i32, i32) {
    %c0_i32 = arith.constant 0 : i32
    %c0_i32_0 = arith.constant 0 : i32
    return %c0_i32, %arg0 : i32, i32
  }
  func.func @transform_2(%arg0: i32) -> (i32, i32) {
    %c0_i32 = arith.constant 0 : i32
    %c0_i32_0 = arith.constant 0 : i32
    return %c0_i32, %arg0 : i32, i32
  }
  func.func @transform_3(%arg0: i32) -> (i32, i32) {
    %c0_i32 = arith.constant 0 : i32
    %c0_i32_0 = arith.constant 0 : i32
    return %c0_i32, %arg0 : i32, i32
  }
  func.func @transform_4(%arg0: i32) -> (i32, i32) {
    %c0_i32 = arith.constant 0 : i32
    %c0_i32_0 = arith.constant 0 : i32
    return %arg0, %c0_i32 : i32, i32
  }
  func.func @transform_5(%arg0: i32) -> (i32, i32) {
    %c0_i32 = arith.constant 0 : i32
    %c0_i32_0 = arith.constant 0 : i32
    %c0_i32_1 = arith.constant 0 : i32
    return %c0_i32, %c0_i32_0 : i32, i32
  }
  func.func @transform_6(%arg0: i32) -> (i32, i32) {
    %c0_i32 = arith.constant 0 : i32
    %c0_i32_0 = arith.constant 0 : i32
    %c0_i32_1 = arith.constant 0 : i32
    return %c0_i32, %c0_i32_0 : i32, i32
  }
}

</mosaic_0001>

<llo_original>
// kernel: tpu_custom_call.1
$region0: #{tpu_custom_call.1}
  #allocation0 [shape = 'u32[]', space=smem, size = 0x4, offset = 0x4, fixed_abs, tag = 'smem constant byte address 0x4 - core index']
  #allocation1 [shape = 'u32[144,128]{1,0:T(1,128)}', space=vmem, size = 0x12000, scoped, tag = 'internal scratch']
  %s0 = inlined_call_operand.hbm [shape: bf16[8,128], index: 0, kind: input, shape index: {}]
  %s1 = inlined_call_operand.hbm [shape: bf16[128,128], index: 1, kind: input, shape index: {}]
  %s2 = inlined_call_operand.vmem [shape: f32[1,128], index: 2, kind: input, shape index: {}]
  %s3 = inlined_call_operand.vmem [shape: f32[1,128], index: 3, kind: input, shape index: {}]
  %s4 = inlined_call_operand.hbm [shape: bf16[128,128], index: 4, kind: input, shape index: {}]
  %s5 = inlined_call_operand.vmem [shape: f32[1,128], index: 5, kind: input, shape index: {}]
  %s6 = inlined_call_operand.hbm [shape: f32[8,128], index: 6, kind: output, shape index: {}]
  %s7 = sld [smem:[#allocation0]]
  $region50: #{tpu_custom_call.1} parent=0
    _
  %s9 = ssub.s32 1, %s7
  %s10 = scalar_select 0, %s9, %s7
  $region1: #{tpu_custom_call.1} parent=0
    #allocation2 [shape = 'u8[2048]{0}', space=vmem, size = 0x800, scoped, tag = 'input window, operand 0, single buffered']
    #allocation3 [shape = 's32[1]{0}', space=sflag, size = 0x4, scoped, tag = 'scoped memory for tpu_custom_call.1']
    #allocation4 [shape = 's32[1]{0}', space=sflag, size = 0x4, scoped, tag = 'scoped memory for tpu_custom_call.1']
    #allocation5 [shape = 'u8[32768]{0}', space=vmem, size = 0x8000, scoped, tag = 'input window, operand 1, single buffered']
    #allocation6 [shape = 's32[1]{0}', space=sflag, size = 0x4, scoped, tag = 'scoped memory for tpu_custom_call.1']
    #allocation7 [shape = 'u8[32768]{0}', space=vmem, size = 0x8000, scoped, tag = 'input window, operand 4, single buffered']
    #allocation8 [shape = 'u8[4096]{0}', space=vmem, size = 0x1000, scoped, tag = 'output window, operand 0, single buffered']
    %11 = vsyncpa [#allocation3], 0
    %12 = vsyncpa [#allocation6], 0
    %13 = vsyncpa [#allocation4], 0
    // Predicated region
    $region2: #{tpu_custom_call.1} parent=1 // pred_check
      _
    $region3: #{tpu_custom_call.1} parent=1 // pred_check_branch
      %15 = sbr.rel (0) target = $region5
    $region4: #{tpu_custom_call.1} parent=1 // pred_region
      %s17 = ssub.s32 64, 64
      %18 = vsyncadd [#allocation3], %s17
      %s20 = sshll.u32 [#allocation2], 4
      %s21 = int_to_ptr.vmem [resolvable:$true] %s20
      %23 = dma.hbm_to_vmem [thread:$0]  %s0, 64, %s21, [#allocation3]
    $region5: #{tpu_custom_call.1} parent=1 // pred_fallthru
      _
    // Predicated region
    $region6: #{tpu_custom_call.1} parent=1 // pred_check
      _
    $region7: #{tpu_custom_call.1} parent=1 // pred_check_branch
      %25 = sbr.rel (0) target = $region9
    $region8: #{tpu_custom_call.1} parent=1 // pred_region
      %s27 = ssub.s32 1024, 1024
      %28 = vsyncadd [#allocation6], %s27
      %s29 = sshll.u32 [#allocation5], 4
      %s30 = int_to_ptr.vmem [resolvable:$true] %s29
      %35 = dma.hbm_to_vmem [thread:$0]  %s1, 1024, %s30, [#allocation6], 64, 64, 4
    $region9: #{tpu_custom_call.1} parent=1 // pred_fallthru
      _
    // Predicated region
    $region10: #{tpu_custom_call.1} parent=1 // pred_check
      _
    $region11: #{tpu_custom_call.1} parent=1 // pred_check_branch
      %37 = sbr.rel (0) target = $region13
    $region12: #{tpu_custom_call.1} parent=1 // pred_region
      _
    $region13: #{tpu_custom_call.1} parent=1 // pred_fallthru
      _
    // Predicated region
    $region14: #{tpu_custom_call.1} parent=1 // pred_check
      _
    $region15: #{tpu_custom_call.1} parent=1 // pred_check_branch
      %39 = sbr.rel (0) target = $region17
    $region16: #{tpu_custom_call.1} parent=1 // pred_region
      _
    $region17: #{tpu_custom_call.1} parent=1 // pred_fallthru
      _
    // Predicated region
    $region18: #{tpu_custom_call.1} parent=1 // pred_check
      _
    $region19: #{tpu_custom_call.1} parent=1 // pred_check_branch
      %41 = sbr.rel (0) target = $region21
    $region20: #{tpu_custom_call.1} parent=1 // pred_region
      %s43 = ssub.s32 1024, 1024
      %44 = vsyncadd [#allocation6], %s43
      %s45 = sshll.u32 [#allocation7], 4
      %s46 = int_to_ptr.vmem [resolvable:$true] %s45
      %51 = dma.hbm_to_vmem [thread:$0]  %s4, 1024, %s46, [#allocation6], 64, 64, 4
    $region21: #{tpu_custom_call.1} parent=1 // pred_fallthru
      _
    // Predicated region
    $region22: #{tpu_custom_call.1} parent=1 // pred_check
      _
    $region23: #{tpu_custom_call.1} parent=1 // pred_check_branch
      %53 = sbr.rel (0) target = $region25
    $region24: #{tpu_custom_call.1} parent=1 // pred_region
      _
    $region25: #{tpu_custom_call.1} parent=1 // pred_fallthru
      _
    // Predicated region
    $region26: #{tpu_custom_call.1} parent=1 // pred_check
      _
    $region27: #{tpu_custom_call.1} parent=1 // pred_check_branch
      %55 = sbr.rel (0) target = $region29
    $region28: #{tpu_custom_call.1} parent=1 // pred_region
      %56 = dma.done [#allocation3], 64
    $region29: #{tpu_custom_call.1} parent=1 // pred_fallthru
      _
    // Predicated region
    $region30: #{tpu_custom_call.1} parent=1 // pred_check
      _
    $region31: #{tpu_custom_call.1} parent=1 // pred_check_branch
      %58 = sbr.rel (0) target = $region33
    $region32: #{tpu_custom_call.1} parent=1 // pred_region
      %59 = dma.done [#allocation6], 1024
    $region33: #{tpu_custom_call.1} parent=1 // pred_fallthru
      _
    // Predicated region
    $region34: #{tpu_custom_call.1} parent=1 // pred_check
      _
    $region35: #{tpu_custom_call.1} parent=1 // pred_check_branch
      %61 = sbr.rel (0) target = $region37
    $region36: #{tpu_custom_call.1} parent=1 // pred_region
      %62 = dma.done [#allocation6], 1024
    $region37: #{tpu_custom_call.1} parent=1 // pred_fallthru
      _
    %p64 = scmp.eq.s32.totalorder 0, 0
    // Predicated region
    $region38: #{tpu_custom_call.1} parent=1 // pred_check
      %p65 = pneg %p64
    $region39: #{tpu_custom_call.1} parent=1 // pred_check_branch
      %67 = sbr.rel (%p65) target = $region41
    $region40: #{tpu_custom_call.1} parent=1 // pred_region
      %v68 = vld [vmem:[%s5] sm:$0x1]
      %v70 = vlaneseq
      %v71 = vshrl.u32 %v70, 7
      %v72 = vsub.s32 0, %v71
      %v73 = vrot.slane %v68, %v72
      %75 = vst [vmem:[#allocation8] sm:$0xff] %v73
    $region41: #{tpu_custom_call.1} parent=1 // pred_fallthru
      _
    %v76 = vld [vmem:[#allocation2] sm:$0xf]
    %v77 = vld [vmem:[#allocation5] sm:$0xf]
    %v78 = vld [vmem:[#allocation5 + $0x4] sm:$0xf]
    %v79 = vld [vmem:[#allocation5 + $0x8] sm:$0xf]
    %v80 = vld [vmem:[#allocation5 + $0xc] sm:$0xf]
    %v81 = vld [vmem:[#allocation5 + $0x10] sm:$0xf]
    %v82 = vld [vmem:[#allocation5 + $0x14] sm:$0xf]
    %v83 = vld [vmem:[#allocation5 + $0x18] sm:$0xf]
    %v84 = vld [vmem:[#allocation5 + $0x1c] sm:$0xf]
    %v85 = vld [vmem:[#allocation5 + $0x20] sm:$0xf]
    %v86 = vld [vmem:[#allocation5 + $0x24] sm:$0xf]
    %v87 = vld [vmem:[#allocation5 + $0x28] sm:$0xf]
    %v88 = vld [vmem:[#allocation5 + $0x2c] sm:$0xf]
    %v89 = vld [vmem:[#allocation5 + $0x30] sm:$0xf]
    %v90 = vld [vmem:[#allocation5 + $0x34] sm:$0xf]
    %v91 = vld [vmem:[#allocation5 + $0x38] sm:$0xf]
    %v92 = vld [vmem:[#allocation5 + $0x3c] sm:$0xf]
    %v109 = vunpack.c.l.b16 %v77
    %v110 = vunpack.c.l.b16 %v78
    %v111 = vunpack.c.l.b16 %v79
    %v112 = vunpack.c.l.b16 %v80
    %v113 = vunpack.c.l.b16 %v81
    %v114 = vunpack.c.l.b16 %v82
    %v115 = vunpack.c.l.b16 %v83
    %v116 = vunpack.c.l.b16 %v84
    %v117 = vunpack.c.l.b16 %v85
    %v118 = vunpack.c.l.b16 %v86
    %v119 = vunpack.c.l.b16 %v87
    %v120 = vunpack.c.l.b16 %v88
    %v121 = vunpack.c.l.b16 %v89
    %v122 = vunpack.c.l.b16 %v90
    %v123 = vunpack.c.l.b16 %v91
    %v124 = vunpack.c.l.b16 %v92
    %v125 = vpack.c.b16 %v110, %v109
    %v126 = vpack.c.b16 %v112, %v111
    %v127 = vpack.c.b16 %v114, %v113
    %v128 = vpack.c.b16 %v116, %v115
    %v129 = vpack.c.b16 %v118, %v117
    %v130 = vpack.c.b16 %v120, %v119
    %v131 = vpack.c.b16 %v122, %v121
    %v132 = vpack.c.b16 %v124, %v123
    %141 = vmatprep.subr.bf16.mxu0 0
    %142 = vmatpush1.bf16.msra.mxu0 %v132
    %143 = vmatprep.subr.bf16.mxu0 0
    %144 = vmatpush1.bf16.msra.mxu0 %v131
    %145 = vmatprep.subr.bf16.mxu0 0
    %146 = vmatpush1.bf16.msra.mxu0 %v130
    %147 = vmatprep.subr.bf16.mxu0 0
    %148 = vmatpush1.bf16.msra.mxu0 %v129
    %149 = vmatprep.subr.bf16.mxu0 0
    %150 = vmatpush1.bf16.msra.mxu0 %v128
    %151 = vmatprep.subr.bf16.mxu0 0
    %152 = vmatpush1.bf16.msra.mxu0 %v127
    %153 = vmatprep.subr.bf16.mxu0 0
    %154 = vmatpush1.bf16.msra.mxu0 %v126
    %155 = vmatprep.subr.bf16.mxu0 0
    %156 = vmatpush1.bf16.msra.mxu0 %v125
    %157 = vmatprep.subr.bf16.mxu0 0
    %158 = vmatpush2.bf16.msra.mxu0 0
    %159 = vmatprep.subr.bf16.mxu0 0
    %160 = vmatpush2.bf16.msra.mxu0 0
    %161 = vmatprep.subr.bf16.mxu0 0
    %162 = vmatpush2.bf16.msra.mxu0 0
    %163 = vmatprep.subr.bf16.mxu0 0
    %164 = vmatpush2.bf16.msra.mxu0 0
    %165 = vmatprep.subr.bf16.mxu0 0
    %166 = vmatpush2.bf16.msra.mxu0 0
    %167 = vmatprep.subr.bf16.mxu0 0
    %168 = vmatpush2.bf16.msra.mxu0 0
    %169 = vmatprep.subr.bf16.mxu0 0
    %170 = vmatpush2.bf16.msra.mxu0 0
    %171 = vmatprep.subr.bf16.mxu0 0
    %172 = vmatpush2.bf16.msra.mxu0 0
    %173 = vmatprep.mubr.bf16.mxu0 0
    %174 = vmatmul.mubr.bf16.gmra.mxu0 %v76
    %v175 = vpop.f32.mrf.mxu0
    %v176 = vadd.f32 0.0, %v175
    %v177 = vpop.f32.mrf.mxu0
    %v178 = vpop.f32.mrf.mxu0
    %v179 = vpop.f32.mrf.mxu0
    %180 = vdwg.mxu0
    %v181 = vrot.slane %v176, 4
    %v182 = vadd.f32 %v176, %v181
    %v183 = vrot.slane %v182, 2
    %v184 = vadd.f32 %v182, %v183
    %v185 = vrot.slane %v184, 1
    %v186 = vadd.f32 %v184, %v185
    %v187 = vmul.f32 %v186, 0.125
    %v188 = vmul.f32 %v176, %v176
    %v189 = vrot.slane %v188, 4
    %v190 = vadd.f32 %v188, %v189
    %v191 = vrot.slane %v190, 2
    %v192 = vadd.f32 %v190, %v191
    %v193 = vrot.slane %v192, 1
    %v194 = vadd.f32 %v192, %v193
    %v195 = vmul.f32 %v194, 0.125
    %v196 = vmul.f32 %v187, %v187
    %v197 = vsub.f32 %v195, %v196
    %v198 = vld [vmem:[%s2] sm:$0x1]
    %v199 = vadd.f32 %v197, 1e-05
    %v200 = vrsqrt.pop %v199
    %v201 = vmul.f32 %v198, %v200
    %v202 = vld [vmem:[%s3] sm:$0x1]
    %v203 = vmul.f32 %v187, %v201
    %v204 = vsub.f32 %v202, %v203
    %v206 = vlaneseq
    %v207 = vshrl.u32 %v206, 7
    %v208 = vsub.s32 0, %v207
    %v209 = vrot.slane %v201, %v208
    %v211 = vmul.f32 %v176, %v209
    %v213 = vlaneseq
    %v214 = vshrl.u32 %v213, 7
    %v215 = vsub.s32 0, %v214
    %v216 = vrot.slane %v204, %v215
    %v218 = vadd.f32 %v211, %v216
    %v219 = vmax.f32 %v218, 0.0
    %v220 = vpack.c.bf16 %v219, %v219
    %v221 = vld [vmem:[#allocation8] sm:$0xff]
    %v222 = vld [vmem:[#allocation7] sm:$0xf]
    %v223 = vld [vmem:[#allocation7 + $0x4] sm:$0xf]
    %v224 = vld [vmem:[#allocation7 + $0x8] sm:$0xf]
    %v225 = vld [vmem:[#allocation7 + $0xc] sm:$0xf]
    %v226 = vld [vmem:[#allocation7 + $0x10] sm:$0xf]
    %v227 = vld [vmem:[#allocation7 + $0x14] sm:$0xf]
    %v228 = vld [vmem:[#allocation7 + $0x18] sm:$0xf]
    %v229 = vld [vmem:[#allocation7 + $0x1c] sm:$0xf]
    %v230 = vld [vmem:[#allocation7 + $0x20] sm:$0xf]
    %v231 = vld [vmem:[#allocation7 + $0x24] sm:$0xf]
    %v232 = vld [vmem:[#allocation7 + $0x28] sm:$0xf]
    %v233 = vld [vmem:[#allocation7 + $0x2c] sm:$0xf]
    %v234 = vld [vmem:[#allocation7 + $0x30] sm:$0xf]
    %v235 = vld [vmem:[#allocation7 + $0x34] sm:$0xf]
    %v236 = vld [vmem:[#allocation7 + $0x38] sm:$0xf]
    %v237 = vld [vmem:[#allocation7 + $0x3c] sm:$0xf]
    %v254 = vunpack.c.l.b16 %v222
    %v255 = vunpack.c.l.b16 %v223
    %v256 = vunpack.c.l.b16 %v224
    %v257 = vunpack.c.l.b16 %v225
    %v258 = vunpack.c.l.b16 %v226
    %v259 = vunpack.c.l.b16 %v227
    %v260 = vunpack.c.l.b16 %v228
    %v261 = vunpack.c.l.b16 %v229
    %v262 = vunpack.c.l.b16 %v230
    %v263 = vunpack.c.l.b16 %v231
    %v264 = vunpack.c.l.b16 %v232
    %v265 = vunpack.c.l.b16 %v233
    %v266 = vunpack.c.l.b16 %v234
    %v267 = vunpack.c.l.b16 %v235
    %v268 = vunpack.c.l.b16 %v236
    %v269 = vunpack.c.l.b16 %v237
    %v270 = vpack.c.b16 %v255, %v254
    %v271 = vpack.c.b16 %v257, %v256
    %v272 = vpack.c.b16 %v259, %v258
    %v273 = vpack.c.b16 %v261, %v260
    %v274 = vpack.c.b16 %v263, %v262
    %v275 = vpack.c.b16 %v265, %v264
    %v276 = vpack.c.b16 %v267, %v266
    %v277 = vpack.c.b16 %v269, %v268
    %286 = vmatprep.subr.bf16.mxu0 0
    %287 = vmatpush1.bf16.msra.mxu0 %v277
    %288 = vmatprep.subr.bf16.mxu0 0
    %289 = vmatpush1.bf16.msra.mxu0 %v276
    %290 = vmatprep.subr.bf16.mxu0 0
    %291 = vmatpush1.bf16.msra.mxu0 %v275
    %292 = vmatprep.subr.bf16.mxu0 0
    %293 = vmatpush1.bf16.msra.mxu0 %v274
    %294 = vmatprep.subr.bf16.mxu0 0
    %295 = vmatpush1.bf16.msra.mxu0 %v273
    %296 = vmatprep.subr.bf16.mxu0 0
    %297 = vmatpush1.bf16.msra.mxu0 %v272
    %298 = vmatprep.subr.bf16.mxu0 0
    %299 = vmatpush1.bf16.msra.mxu0 %v271
    %300 = vmatprep.subr.bf16.mxu0 0
    %301 = vmatpush1.bf16.msra.mxu0 %v270
    %302 = vmatprep.subr.bf16.mxu0 0
    %303 = vmatpush2.bf16.msra.mxu0 0
    %304 = vmatprep.subr.bf16.mxu0 0
    %305 = vmatpush2.bf16.msra.mxu0 0
    %306 = vmatprep.subr.bf16.mxu0 0
    %307 = vmatpush2.bf16.msra.mxu0 0
    %308 = vmatprep.subr.bf16.mxu0 0
    %309 = vmatpush2.bf16.msra.mxu0 0
    %310 = vmatprep.subr.bf16.mxu0 0
    %311 = vmatpush2.bf16.msra.mxu0 0
    %312 = vmatprep.subr.bf16.mxu0 0
    %313 = vmatpush2.bf16.msra.mxu0 0
    %314 = vmatprep.subr.bf16.mxu0 0
    %315 = vmatpush2.bf16.msra.mxu0 0
    %316 = vmatprep.subr.bf16.mxu0 0
    %317 = vmatpush2.bf16.msra.mxu0 0
    %318 = vmatprep.mubr.bf16.mxu0 0
    %319 = vmatmul.mubr.bf16.gmra.mxu0 %v220
    %v320 = vpop.f32.mrf.mxu0
    %v321 = vadd.f32 0.0, %v320
    %v322 = vpop.f32.mrf.mxu0
    %v323 = vpop.f32.mrf.mxu0
    %v324 = vpop.f32.mrf.mxu0
    %325 = vdwg.mxu0
    %v326 = vadd.f32 %v221, %v321
    %327 = vst [vmem:[#allocation8] sm:$0xff] %v326
    // Predicated region
    $region42: #{tpu_custom_call.1} parent=1 // pred_check
      _
    $region43: #{tpu_custom_call.1} parent=1 // pred_check_branch
      %329 = sbr.rel (0) target = $region45
    $region44: #{tpu_custom_call.1} parent=1 // pred_region
      %s331 = ssub.s32 128, 128
      %332 = vsyncadd [#allocation4], %s331
      %s334 = sshll.u32 [#allocation8], 4
      %s335 = int_to_ptr.vmem [resolvable:$true] %s334
      %337 = dma.vmem_to_hbm [thread:$0]  %s335, 128, %s6, [#allocation4]
    $region45: #{tpu_custom_call.1} parent=1 // pred_fallthru
      _
    // Predicated region
    $region46: #{tpu_custom_call.1} parent=1 // pred_check
      _
    $region47: #{tpu_custom_call.1} parent=1 // pred_check_branch
      %339 = sbr.rel (0) target = $region49
    $region48: #{tpu_custom_call.1} parent=1 // pred_region
      %340 = dma.done [#allocation4], 128
    $region49: #{tpu_custom_call.1} parent=1 // pred_fallthru
      _
    %341 = vsyncpa [#allocation3], 1
    %342 = vsyncpa [#allocation6], 1
    %343 = vsyncpa [#allocation4], 1

</llo_original>
